<compile_context>
chip_gen: v7x
topology: tpu7x:2x2x1
jax: 0.10.0
libtpu: 0.0.40
codegen_flags: <defaults>
</compile_context>

<pallas_src>
import jax
import jax.numpy as jnp
from jax import lax
from jax.experimental import pallas as pl
from jax.experimental.pallas import tpu as pltpu


# ----------------------------------------------------------------------------
# VMEM-budget helpers (generation aware)
# ----------------------------------------------------------------------------
def _vmem_capacity_bytes():
    try:
        return int(pltpu.get_tpu_info().vmem_capacity_bytes)
    except Exception:
        return 64 * 1024 * 1024            # conservative (v7x-sized) fallback


def _vmem_limit_bytes():
    cap = _vmem_capacity_bytes()
    # ~48 MiB on v7x (64 MiB physical), 96 MiB on v5e/v6e (128 MiB physical).
    return min(int(cap * 0.75), 96 * 1024 * 1024)


def _pick_tn(n_pts, c, itemsize, batch):
    """Largest TN (multiple of 128) whose per-step working set fits a
    generation-aware VMEM budget.  Working set per point per step:
      * double-buffered inputs: 2 * (C*itemsize logits + 4B label)
      * in-kernel f32 temporaries (upcast tile, exp, one-hot/select, iota):
        ~4 slabs of C * 4 bytes
    """
    cap = _vmem_capacity_bytes()
    budget = int(cap * 0.35)               # ~22 MiB on v7x, ~45 MiB on v5e/v6e
    per_point = 2 * (c * itemsize + 4) + 4 * c * 4
    tn = (budget // per_point) // 128 * 128
    n_round = pl.cdiv(n_pts, 128) * 128
    tn = max(128, min(tn, n_round))
    if batch == 1 and n_pts > 128:
        # keep at least two grid cells so v7x megacore has work to split
        tn = min(tn, max(128, pl.cdiv(pl.cdiv(n_pts, 2), 128) * 128))
    return int(tn)


# ----------------------------------------------------------------------------
# Kernel: per-(batch, N-tile) partial NLL sum + valid-point count
# ----------------------------------------------------------------------------
def _make_ce_kernel(n_valid, tn):
    def kernel(ign_ref, logits_ref, labels_ref, nll_ref, cnt_ref):
        # logits_ref: (1, C, TN), labels_ref: (1, 1, TN) int32
        # nll_ref / cnt_ref: (1, 1, 1, 1) f32
        x = logits_ref[0].astype(jnp.float32)       # (C, TN) upcast in-register
        lab = labels_ref[0]                         # (1, TN) int32
        ign = ign_ref[0]                            # SMEM scalar (ignore_index or -1)
        c, t = x.shape

        # Validity mask: inside the real point range, non-negative label,
        # and not the ignore_index.  Garbage lanes of a ragged tail tile are
        # excluded by the point-index test (labels there are never touched
        # arithmetically, only compared).
        pt = pl.program_id(1) * tn + lax.broadcasted_iota(jnp.int32, (1, t), 1)
        valid = (pt < n_valid) & (lab >= 0) & (lab != ign)

        # logsumexp over the class (sublane) axis
        m = jnp.max(x, axis=0, keepdims=True)                              # (1, TN)
        lse = m + jnp.log(jnp.sum(jnp.exp(x - m), axis=0, keepdims=True))  # (1, TN)

        # one-hot gather of the target-class logit (labels assumed < C,
        # matching torch's undefined behaviour otherwise)
        cls = lax.broadcasted_iota(jnp.int32, (c, t), 0)
        picked = jnp.sum(jnp.where(cls == lab, x, 0.0), axis=0, keepdims=True)

        nll = jnp.where(valid, lse - picked, 0.0)                          # (1, TN)
        nll_ref[...] = jnp.sum(nll).reshape(1, 1, 1, 1)
        cnt_ref[...] = jnp.sum(valid.astype(jnp.float32)).reshape(1, 1, 1, 1)

    return kernel


def _cross_entropy_partials(logits, labels_i32, ignore_val):
    """Returns (sum of NLL over valid points, number of valid points)."""
    B, C, N = logits.shape
    TN = _pick_tn(N, C, logits.dtype.itemsize, B)
    n_tiles = pl.cdiv(N, TN)

    lab3 = labels_i32.reshape(B, 1, N)                 # metadata-only reshape
    ign_arr = jnp.asarray([ignore_val], dtype=jnp.int32)

    nll, cnt = pl.pallas_call(
        _make_ce_kernel(N, TN),
        out_shape=(jax.ShapeDtypeStruct((B, n_tiles, 1, 1), jnp.float32),
                   jax.ShapeDtypeStruct((B, n_tiles, 1, 1), jnp.float32)),
        grid_spec=pltpu.PrefetchScalarGridSpec(
            num_scalar_prefetch=1,                      # ignore_index scalar in SMEM
            grid=(B, n_tiles),
            in_specs=[
                pl.BlockSpec((1, C, TN), lambda b, n, ign: (b, 0, n)),
                pl.BlockSpec((1, 1, TN), lambda b, n, ign: (b, 0, n)),
            ],
            out_specs=[
                pl.BlockSpec((1, 1, 1, 1), lambda b, n, ign: (b, n, 0, 0)),
                pl.BlockSpec((1, 1, 1, 1), lambda b, n, ign: (b, n, 0, 0)),
            ],
        ),
        compiler_params=pltpu.CompilerParams(
            dimension_semantics=("parallel", "parallel"),
            vmem_limit_bytes=_vmem_limit_bytes()),
    )(ign_arr, logits, lab3)

    # Cheap exact tree-reduce of the per-tile partials in plain JAX.
    return jnp.sum(nll), jnp.sum(cnt)


def cross_entropy_mean(logits, labels, ignore_index=None):
    B, C, N = logits.shape
    labels = labels.astype(jnp.int32)
    ign_val = int(ignore_index) if ignore_index is not None else -1
    nll_sum, valid_cnt = _cross_entropy_partials(logits, labels, ign_val)
    if ignore_index is not None:
        denom = jnp.maximum(valid_cnt, 1.0)
    else:
        denom = jnp.float32(B * N)
    return nll_sum / denom


# ----------------------------------------------------------------------------
# Transform regularizer  mean_b || T_b T_b^T - I ||_F
# Tiny (B*d*d ~ <1 MiB, ~MFLOPs): left in plain JAX per perf review — a
# separate pallas_call launch costs more than the whole computation, and the
# exact diff form avoids the cancellation of the expanded-form variant.
# ----------------------------------------------------------------------------
def transform_regularizer(trans):
    t = trans.astype(jnp.float32)
    d = t.shape[1]
    mm = jnp.einsum("bij,bkj->bik", t, t)
    diff = mm - jnp.eye(d, dtype=jnp.float32)[None]
    return jnp.mean(jnp.sqrt(jnp.sum(diff * diff, axis=(1, 2))))


# ----------------------------------------------------------------------------
# Module equivalent of FocalLoss
# ----------------------------------------------------------------------------
class FocalLossPallas:
    def __init__(self, alpha=0.25, gamma=2, mat_diff_loss_scale=0.001,
                 lovasz_weight=None, ignore_index=None):
        self.alpha = alpha
        self.gamma = gamma
        self.mat_diff_loss_scale = mat_diff_loss_scale
        self.lovasz_weight = lovasz_weight
        self.ignore_index = ignore_index

    def __call__(self, logits, labels, trans_feats=None):
        loss_dict = {}
        ce_loss = cross_entropy_mean(logits, labels, self.ignore_index)
        pt = jnp.exp(-ce_loss)
        focal_loss = self.alpha * (1.0 - pt) ** self.gamma * ce_loss
        total_loss = focal_loss
        loss_dict["focal_loss"] = focal_loss
        if self.lovasz_weight is not None:
            # TODO(synk): LovaszSoftmaxLoss needs a data-dependent per-class sort
            # with no clean Pallas equivalent; disabled by default (lovasz_weight=None).
            raise NotImplementedError("Lovasz-Softmax path not implemented")
        if trans_feats is not None:
            mat_diff_loss = transform_regularizer(trans_feats)
            loss_dict["transform_loss"] = mat_diff_loss * self.mat_diff_loss_scale
            total_loss = total_loss + loss_dict["transform_loss"]
        loss_dict["loss"] = total_loss
        return loss_dict


# ----------------------------------------------------------------------------
# Pure-JAX reference for verification
# ----------------------------------------------------------------------------
def _ref_ce(logits, labels, ignore_index=None):
    C = logits.shape[1]
    logp = jax.nn.log_softmax(logits.astype(jnp.float32), axis=1)
    safe = jnp.clip(labels, 0, C - 1)
    nll = -jnp.take_along_axis(logp, safe[:, None, :], axis=1)[:, 0, :]
    if ignore_index is None:
        return jnp.mean(nll)
    valid = labels != ignore_index
    return jnp.sum(jnp.where(valid, nll, 0.0)) / jnp.maximum(jnp.sum(valid), 1)


def _ref_focal(ce, alpha, gamma):
    pt = jnp.exp(-ce)
    return alpha * (1.0 - pt) ** gamma * ce


def _ref_transform(trans):
    d = trans.shape[1]
    mm = jnp.einsum("bij,bkj->bik", trans, trans)
    diff = mm - jnp.eye(d)[None]
    return jnp.mean(jnp.sqrt(jnp.sum(diff * diff, axis=(1, 2))))


if __name__ == "__main__":
    # N deliberately not a multiple of 128 to exercise the ragged-tail mask;
    # C=4 exercises the full-class-dim (unpadded) block path.
    B, C, N, D = 2, 4, 200, 64

    key = jax.random.PRNGKey(0)
    k1, k2, k3, k4 = jax.random.split(key, 4)
    logits = jax.random.normal(k1, (B, C, N), dtype=jnp.float32)
    labels = jax.random.randint(k2, (B, N), 0, C, dtype=jnp.int32)
    trans_feats = jax.random.normal(k3, (B, D, D), dtype=jnp.float32) * 0.1

    # --- default path (no ignore_index) ---
    loss_fn = FocalLossPallas(alpha=0.25, gamma=2, mat_diff_loss_scale=0.001)
    out = loss_fn(logits, labels, trans_feats)
    jax.block_until_ready(out["loss"])

    ce_ref = _ref_ce(logits, labels)
    focal_ref = _ref_focal(ce_ref, 0.25, 2)
    tr_ref = _ref_transform(trans_feats) * 0.001
    assert jnp.allclose(out["focal_loss"], focal_ref, rtol=1e-4, atol=1e-5), (
        out["focal_loss"], focal_ref)
    assert jnp.allclose(out["transform_loss"], tr_ref, rtol=1e-4, atol=1e-5), (
        out["transform_loss"], tr_ref)
    assert jnp.allclose(out["loss"], focal_ref + tr_ref, rtol=1e-4, atol=1e-5), (
        out["loss"], focal_ref + tr_ref)

    # --- ignore_index path (handled fully in-kernel via scalar prefetch) ---
    ignore_index = -100
    drop = jax.random.bernoulli(k4, 0.25, (B, N))
    labels_ign = jnp.where(drop, jnp.int32(ignore_index), labels)
    loss_fn_ign = FocalLossPallas(alpha=0.25, gamma=2, ignore_index=ignore_index)
    out2 = loss_fn_ign(logits, labels_ign)
    jax.block_until_ready(out2["loss"])

    ce_ref2 = _ref_ce(logits, labels_ign, ignore_index)
    focal_ref2 = _ref_focal(ce_ref2, 0.25, 2)
    assert jnp.allclose(out2["focal_loss"], focal_ref2, rtol=1e-4, atol=1e-5), (
        out2["focal_loss"], focal_ref2)

    print("KERNEL_OK")
</pallas_src>

<mosaic_0001>
module attributes {stable_mosaic.version = 11 : i64} {
  func.func @kernel(%arg0: i32, %arg1: i32, %arg2: memref<1xi32, #tpu.memory_space<smem>>, %arg3: memref<1x4x256xf32, #tpu.memory_space<vmem>>, %arg4: memref<1x1x256xi32, #tpu.memory_space<vmem>>, %arg5: memref<1x1x1x1xf32, #tpu.memory_space<vmem>>, %arg6: memref<1x1x1x1xf32, #tpu.memory_space<vmem>>) attributes {dimension_semantics = [#tpu.dimension_semantics<parallel>, #tpu.dimension_semantics<parallel>], iteration_bounds = array<i64: 2, 1>, scalar_prefetch = 1 : i64, scratch_operands = 0 : i64, tpu.core_type = #tpu.core_type<tc>, window_params = [{transform_indices = @transform_0, window_bounds = array<i64: 1, 4, 256>}, {transform_indices = @transform_1, window_bounds = array<i64: 1, 1, 256>}, {transform_indices = @transform_2, window_bounds = array<i64: 1, 1, 1, 1>}, {transform_indices = @transform_3, window_bounds = array<i64: 1, 1, 1, 1>}]} {
    %c0 = arith.constant 0 : index
    %c0_0 = arith.constant 0 : index
    %c0_1 = arith.constant 0 : index
    %0 = vector.load %arg3[%c0, %c0_0, %c0_1] : memref<1x4x256xf32, #tpu.memory_space<vmem>>, vector<1x4x256xf32>
    %1 = vector.shape_cast %0 : vector<1x4x256xf32> to vector<4x256xf32>
    %c0_2 = arith.constant 0 : index
    %c0_3 = arith.constant 0 : index
    %c0_4 = arith.constant 0 : index
    %2 = vector.load %arg4[%c0_2, %c0_3, %c0_4] : memref<1x1x256xi32, #tpu.memory_space<vmem>>, vector<1x1x256xi32>
    %3 = vector.shape_cast %2 : vector<1x1x256xi32> to vector<1x256xi32>
    %c0_5 = arith.constant 0 : index
    %4 = memref.load %arg2[%c0_5] : memref<1xi32, #tpu.memory_space<smem>>
    %c256_i32 = arith.constant 256 : i32
    %5 = arith.muli %arg1, %c256_i32 : i32
    %6 = tpu.iota {dimensions = array<i32: 1>} : vector<1x256xi32>
    %7 = vector.broadcast %5 : i32 to vector<1x256xi32>
    %8 = arith.addi %7, %6 : vector<1x256xi32>
    %c200_i32 = arith.constant 200 : i32
    %9 = vector.broadcast %c200_i32 : i32 to vector<1x256xi32>
    %10 = arith.cmpi slt, %8, %9 : vector<1x256xi32>
    %c0_i32 = arith.constant 0 : i32
    %11 = vector.broadcast %c0_i32 : i32 to vector<1x256xi32>
    %12 = arith.cmpi sge, %3, %11 : vector<1x256xi32>
    %13 = arith.andi %10, %12 : vector<1x256xi1>
    %14 = vector.broadcast %4 : i32 to vector<1x256xi32>
    %15 = arith.cmpi ne, %3, %14 : vector<1x256xi32>
    %16 = arith.andi %13, %15 : vector<1x256xi1>
    %cst = arith.constant dense<0xFF800000> : vector<256xf32>
    %17 = vector.multi_reduction <maximumf>, %1, %cst [0] : vector<4x256xf32> to vector<256xf32>
    %18 = vector.shape_cast %17 : vector<256xf32> to vector<1x256xf32>
    %19 = vector.broadcast %18 : vector<1x256xf32> to vector<4x256xf32>
    %20 = arith.subf %1, %19 : vector<4x256xf32>
    %21 = math.exp %20 : vector<4x256xf32>
    %cst_6 = arith.constant dense<0.000000e+00> : vector<256xf32>
    %22 = vector.multi_reduction <add>, %21, %cst_6 [0] : vector<4x256xf32> to vector<256xf32>
    %23 = vector.shape_cast %22 : vector<256xf32> to vector<1x256xf32>
    %24 = math.log %23 : vector<1x256xf32>
    %25 = arith.addf %18, %24 : vector<1x256xf32>
    %26 = tpu.iota {dimensions = array<i32: 0>} : vector<4x256xi32>
    %27 = vector.broadcast %3 : vector<1x256xi32> to vector<4x256xi32>
    %28 = arith.cmpi eq, %26, %27 : vector<4x256xi32>
    %cst_7 = arith.constant 0.000000e+00 : f32
    %29 = vector.broadcast %cst_7 : f32 to vector<4x256xf32>
    %30 = arith.select %28, %1, %29 : vector<4x256xi1>, vector<4x256xf32>
    %cst_8 = arith.constant dense<0.000000e+00> : vector<256xf32>
    %31 = vector.multi_reduction <add>, %30, %cst_8 [0] : vector<4x256xf32> to vector<256xf32>
    %32 = vector.shape_cast %31 : vector<256xf32> to vector<1x256xf32>
    %33 = arith.subf %25, %32 : vector<1x256xf32>
    %cst_9 = arith.constant 0.000000e+00 : f32
    %34 = vector.broadcast %cst_9 : f32 to vector<1x256xf32>
    %35 = arith.select %16, %33, %34 : vector<1x256xi1>, vector<1x256xf32>
    %36 = vector.shape_cast %35 : vector<1x256xf32> to vector<1x1x256xf32>
    %cst_10 = arith.constant dense<0.000000e+00> : vector<1xf32>
    %37 = vector.multi_reduction <add>, %36, %cst_10 [1, 2] : vector<1x1x256xf32> to vector<1xf32>
    %38 = vector.shape_cast %37 : vector<1xf32> to vector<1x1x1xf32>
    %39 = vector.extract %38[0, 0, 0] : f32 from vector<1x1x1xf32>
    %40 = vector.broadcast %39 : f32 to vector<1x1x1x1xf32>
    %c0_11 = arith.constant 0 : index
    %c0_12 = arith.constant 0 : index
    %c0_13 = arith.constant 0 : index
    %c0_14 = arith.constant 0 : index
    %41 = vector.load %arg5[%c0_11, %c0_12, %c0_13, %c0_14] : memref<1x1x1x1xf32, #tpu.memory_space<vmem>>, vector<1x1x1x1xf32>
    tpu.vector_store %arg5[%c0_11, %c0_12, %c0_13, %c0_14], %40 {strides = array<i32>} : memref<1x1x1x1xf32, #tpu.memory_space<vmem>>, vector<1x1x1x1xf32>,
    %42 = arith.extui %16 : vector<1x256xi1> to vector<1x256xi32>
    %43 = arith.sitofp %42 : vector<1x256xi32> to vector<1x256xf32>
    %44 = vector.shape_cast %43 : vector<1x256xf32> to vector<1x1x256xf32>
    %cst_15 = arith.constant dense<0.000000e+00> : vector<1xf32>
    %45 = vector.multi_reduction <add>, %44, %cst_15 [1, 2] : vector<1x1x256xf32> to vector<1xf32>
    %46 = vector.shape_cast %45 : vector<1xf32> to vector<1x1x1xf32>
    %47 = vector.extract %46[0, 0, 0] : f32 from vector<1x1x1xf32>
    %48 = vector.broadcast %47 : f32 to vector<1x1x1x1xf32>
    %c0_16 = arith.constant 0 : index
    %c0_17 = arith.constant 0 : index
    %c0_18 = arith.constant 0 : index
    %c0_19 = arith.constant 0 : index
    %49 = vector.load %arg6[%c0_16, %c0_17, %c0_18, %c0_19] : memref<1x1x1x1xf32, #tpu.memory_space<vmem>>, vector<1x1x1x1xf32>
    tpu.vector_store %arg6[%c0_16, %c0_17, %c0_18, %c0_19], %48 {strides = array<i32>} : memref<1x1x1x1xf32, #tpu.memory_space<vmem>>, vector<1x1x1x1xf32>,
    return
  }
  func.func @transform_0(%arg0: i32, %arg1: i32, %arg2: memref<1xi32, #tpu.memory_space<smem>>) -> (i32, i32, i32) {
    %c0_i32 = arith.constant 0 : i32
    %c0_i32_0 = arith.constant 0 : i32
    return %arg0, %c0_i32, %arg1 : i32, i32, i32
  }
  func.func @transform_1(%arg0: i32, %arg1: i32, %arg2: memref<1xi32, #tpu.memory_space<smem>>) -> (i32, i32, i32) {
    %c0_i32 = arith.constant 0 : i32
    %c0_i32_0 = arith.constant 0 : i32
    return %arg0, %c0_i32, %arg1 : i32, i32, i32
  }
  func.func @transform_2(%arg0: i32, %arg1: i32, %arg2: memref<1xi32, #tpu.memory_space<smem>>) -> (i32, i32, i32, i32) {
    %c0_i32 = arith.constant 0 : i32
    %c0_i32_0 = arith.constant 0 : i32
    %c0_i32_1 = arith.constant 0 : i32
    return %arg0, %arg1, %c0_i32, %c0_i32_0 : i32, i32, i32, i32
  }
  func.func @transform_3(%arg0: i32, %arg1: i32, %arg2: memref<1xi32, #tpu.memory_space<smem>>) -> (i32, i32, i32, i32) {
    %c0_i32 = arith.constant 0 : i32
    %c0_i32_0 = arith.constant 0 : i32
    %c0_i32_1 = arith.constant 0 : i32
    return %arg0, %arg1, %c0_i32, %c0_i32_0 : i32, i32, i32, i32
  }
}

</mosaic_0001>

<llo_original>
// kernel: tpu_custom_call.1
$region0: #{tpu_custom_call.1}
  #allocation0 [shape = 'u32[]', space=smem, size = 0x4, offset = 0x4, fixed_abs, tag = 'smem constant byte address 0x4 - core index']
  #allocation1 [shape = 'u32[144,128]{1,0:T(1,128)}', space=vmem, size = 0x12000, scoped, tag = 'internal scratch']
  #allocation2 [shape = 's32[1]{0}', space=sflag, size = 0x4, scoped, tag = 'scoped memory for tpu_custom_call.1']
  #allocation3 [shape = 's32[1]{0:T(128)S(6)}', space=smem, size = 0x200, scoped, tag = 'prefetched SMEM operand 0']
  %s0 = inlined_call_operand.<no memory space> [shape: s32[1], index: 0, kind: input, shape index: {}]
  %s1 = inlined_call_operand.hbm [shape: f32[2,4,200], index: 1, kind: input, shape index: {}]
  %s2 = inlined_call_operand.vmem [shape: s32[2,1,200], index: 2, kind: input, shape index: {}]
  %s3 = inlined_call_operand.vmem [shape: f32[2,1,1,1], index: 3, kind: output, shape index: {0}]
  %s4 = inlined_call_operand.vmem [shape: f32[2,1,1,1], index: 4, kind: output, shape index: {1}]
  %5 = xla_tuple %s3, %s4
  %s6 = sld [smem:[#allocation0]]
  $region53: #{tpu_custom_call.1} parent=0
    _
  %s8 = ssub.s32 1, %s6
  %s9 = scalar_select 0, %s8, %s6
  %10 = sst [smem:[#allocation3]] %s0
  $region1: #{tpu_custom_call.1} parent=0
    #allocation4 [shape = 'u8[8192]{0}', space=vmem, size = 0x2000, scoped, tag = 'input window, operand 1']
    #allocation5 [shape = 's32[2]{0}', space=sflag, size = 0x8, scoped, tag = 'scoped memory for tpu_custom_call.1']
    %11 = vsyncpa [#allocation5], 0
    %s12 = scalar_lea.sflag [#allocation5], 1
    %13 = vsyncpa %s12, 0
    loop: start=0, step=1, limit=4
    $region2: #{tpu_custom_call.1} parent=1 // loop_pre_header
      _
    $region3: #{tpu_custom_call.1} parent=1 // loop_header
      %s15 = sphi 0, %s19
      %p16 = scmp.ge.s32.totalorder %s15, 4
      %s22 = sphi 0, %s34
      %s23 = sphi 0, %s30
      %s24 = sphi 0, %s22
      %s25 = sphi 0, %s23
      %s26 = sphi 0, %s24
      %s27 = sphi 0, %s25
      %s39 = sphi 0, %s41
      %s42 = sphi 0, %s39
      %s43 = sphi 0, %s42
      %s59 = sphi 0, %s43
      %s67 = sphi 0, %s69
      %s70 = sphi 0, %s67
      %s71 = sphi 0, %s70
      %s87 = sphi 0, %s71
      %s95 = sphi 0, %s97
      %s98 = sphi 0, %s95
      %s99 = sphi 0, %s98
      %s115 = sphi 0, %s99
      %s123 = sphi 0, %s125
      %s126 = sphi 0, %s123
      %s127 = sphi 0, %s126
      %s143 = sphi 0, %s127
    $region4: #{tpu_custom_call.1} parent=1 // loop_header_branch
      %18 = sbr.rel (%p16) target = $region8
    $region5: #{tpu_custom_call.1} parent=1 // loop_body
      %s20 = ssub.s32 %s15, 1
      %s21 = ssub.s32 %s15, 2
      %s28 = sadd.s32 1, %s23
      %p29 = scmp.ge.s32.totalorder %s28, 1
      %s30 = scalar_select %p29, 0, %s28
      %s31 = sadd.s32 1, %s22
      %s32 = scalar_select %p29, %s31, %s22
      %p33 = scmp.ge.s32.totalorder %s32, 2
      %s34 = scalar_select %p33, 0, %s32
      %s35 = ssub.s32 %s22, %s34
      %s36 = ssub.s32 %s23, %s30
      %s37 = sor.u32 %s35, %s36
      %p38 = scmp.eq.s32.totalorder %s37, 0
      %s40 = sadd.s32 %s39, 1
      %s41 = scalar_select %p38, %s39, %s40
      %p44 = pneg %p38
      %p45 = scmp.eq.s32.totalorder %s15, 1
      %p46 = por %p44, %p45
      %p47 = scmp.ne.s32.totalorder %s39, %s42
      %p48 = scmp.eq.s32.totalorder %s15, 0
      %p49 = por %p47, %p48
      %p50 = scmp.ne.s32.totalorder %s39, %s42
      %p51 = scmp.eq.s32.totalorder %s20, 1
      %p52 = por %p50, %p51
      %p53 = scmp.ne.s32.totalorder %s42, %s43
      %p54 = scmp.eq.s32.totalorder %s20, 0
      %p55 = por %p53, %p54
      %p56 = scmp.ne.s32.totalorder %s42, %s43
      %p57 = scmp.eq.s32.totalorder %s21, 1
      %p58 = por %p56, %p57
      %p60 = scmp.ne.s32.totalorder %s43, %s59
      %p61 = scmp.eq.s32.totalorder %s21, 0
      %p62 = por %p60, %p61
      %s63 = ssub.s32 %s22, %s34
      %s64 = ssub.s32 %s23, %s30
      %s65 = sor.u32 %s63, %s64
      %p66 = scmp.eq.s32.totalorder %s65, 0
      %s68 = sadd.s32 %s67, 1
      %s69 = scalar_select %p66, %s67, %s68
      %p72 = pneg %p66
      %p73 = scmp.eq.s32.totalorder %s15, 1
      %p74 = por %p72, %p73
      %p75 = scmp.ne.s32.totalorder %s67, %s70
      %p76 = scmp.eq.s32.totalorder %s15, 0
      %p77 = por %p75, %p76
      %p78 = scmp.ne.s32.totalorder %s67, %s70
      %p79 = scmp.eq.s32.totalorder %s20, 1
      %p80 = por %p78, %p79
      %p81 = scmp.ne.s32.totalorder %s70, %s71
      %p82 = scmp.eq.s32.totalorder %s20, 0
      %p83 = por %p81, %p82
      %p84 = scmp.ne.s32.totalorder %s70, %s71
      %p85 = scmp.eq.s32.totalorder %s21, 1
      %p86 = por %p84, %p85
      %p88 = scmp.ne.s32.totalorder %s71, %s87
      %p89 = scmp.eq.s32.totalorder %s21, 0
      %p90 = por %p88, %p89
      %s91 = ssub.s32 %s22, %s34
      %s92 = ssub.s32 %s23, %s30
      %s93 = sor.u32 %s91, %s92
      %p94 = scmp.eq.s32.totalorder %s93, 0
      %s96 = sadd.s32 %s95, 1
      %s97 = scalar_select %p94, %s95, %s96
      %p100 = pneg %p94
      %p101 = scmp.eq.s32.totalorder %s15, 1
      %p102 = por %p100, %p101
      %p103 = scmp.ne.s32.totalorder %s95, %s98
      %p104 = scmp.eq.s32.totalorder %s15, 0
      %p105 = por %p103, %p104
      %p106 = scmp.ne.s32.totalorder %s95, %s98
      %p107 = scmp.eq.s32.totalorder %s20, 1
      %p108 = por %p106, %p107
      %p109 = scmp.ne.s32.totalorder %s98, %s99
      %p110 = scmp.eq.s32.totalorder %s20, 0
      %p111 = por %p109, %p110
      %p112 = scmp.ne.s32.totalorder %s98, %s99
      %p113 = scmp.eq.s32.totalorder %s21, 1
      %p114 = por %p112, %p113
      %p116 = scmp.ne.s32.totalorder %s99, %s115
      %p117 = scmp.eq.s32.totalorder %s21, 0
      %p118 = por %p116, %p117
      %s119 = ssub.s32 %s22, %s34
      %s120 = ssub.s32 %s23, %s30
      %s121 = sor.u32 %s119, %s120
      %p122 = scmp.eq.s32.totalorder %s121, 0
      %s124 = sadd.s32 %s123, 1
      %s125 = scalar_select %p122, %s123, %s124
      %p128 = pneg %p122
      %p129 = scmp.eq.s32.totalorder %s15, 1
      %p130 = por %p128, %p129
      %p131 = scmp.ne.s32.totalorder %s123, %s126
      %p132 = scmp.eq.s32.totalorder %s15, 0
      %p133 = por %p131, %p132
      %p134 = scmp.ne.s32.totalorder %s123, %s126
      %p135 = scmp.eq.s32.totalorder %s20, 1
      %p136 = por %p134, %p135
      %p137 = scmp.ne.s32.totalorder %s126, %s127
      %p138 = scmp.eq.s32.totalorder %s20, 0
      %p139 = por %p137, %p138
      %p140 = scmp.ne.s32.totalorder %s126, %s127
      %p141 = scmp.eq.s32.totalorder %s21, 1
      %p142 = por %p140, %p141
      %p144 = scmp.ne.s32.totalorder %s127, %s143
      %p145 = scmp.eq.s32.totalorder %s21, 0
      %p146 = por %p144, %p145
      %p147 = scmp.le.s32.totalorder 1, %s15
      %p148 = scmp.lt.s32.totalorder %s15, 3
      %p149 = pnand %p147, %p148
      %p150 = pneg %p149
      // Predicated region
      $region9: #{tpu_custom_call.1} parent=5 // pred_check
        _
      $region10: #{tpu_custom_call.1} parent=5 // pred_check_branch
        %152 = sbr.rel (%p149) target = $region12
      $region11: #{tpu_custom_call.1} parent=5 // pred_region
        %s153 = ssub.s32 %s15, 1
      $region12: #{tpu_custom_call.1} parent=5 // pred_fallthru
        _
      %p154 = scmp.lt.s32.totalorder %s15, 2
      // Predicated region
      $region13: #{tpu_custom_call.1} parent=5 // pred_check
        %p155 = pneg %p154
      $region14: #{tpu_custom_call.1} parent=5 // pred_check_branch
        %157 = sbr.rel (%p155) target = $region16
      $region15: #{tpu_custom_call.1} parent=5 // pred_region
        // Predicated region
        $region17: #{tpu_custom_call.1} parent=15 // pred_check
          %p158 = pneg %p49
        $region18: #{tpu_custom_call.1} parent=15 // pred_check_branch
          %160 = sbr.rel (%p158) target = $region20
        $region19: #{tpu_custom_call.1} parent=15 // pred_region
          %s161 = sand.u32 %s39, 1
          %s162 = scalar_lea.sflag [#allocation5], %s161
          %s163 = sand.u32 %s39, 1
          %s164 = smul.addr %s163, 8
          %s165 = scalar_lea.vmem [#allocation4], %s164
          %s166 = smul.u32 2, %s23
          %s168 = ssub.s32 128, 128
          %169 = vsyncadd %s162, %s168
          %s170 = smul.addr %s22, 2
          %s171 = sadd.s32 %s166, %s170
          %s172 = smul.addr %s171, 64
          %s173 = scalar_lea.hbm %s1, %s172
          %s175 = sshll.u32 %s165, 4
          %s176 = int_to_ptr.vmem [resolvable:$true] %s175
          %178 = dma.hbm_to_vmem [thread:$0]  %s173, 128, %s176, %s162
        $region20: #{tpu_custom_call.1} parent=15 // pred_fallthru
          _
        // Predicated region
        $region21: #{tpu_custom_call.1} parent=15 // pred_check
          %p179 = pneg %p77
        $region22: #{tpu_custom_call.1} parent=15 // pred_check_branch
          %181 = sbr.rel (%p179) target = $region24
        $region23: #{tpu_custom_call.1} parent=15 // pred_region
          %s182 = smul.u32 2, %s23
          %p183 = scmp.lt.s32.totalorder %s22, 1
          %s184 = scalar_select %p183, %s22, 1
          %p185 = scmp.lt.s32.totalorder %s182, 1
          %s186 = scalar_select %p185, %s182, 1
          %s187 = smul.addr %s184, 2
          %s188 = sadd.s32 %s186, %s187
          %s189 = scalar_lea.vmem %s2, %s188
          %s190 = smul.u32 2, %s23
        $region24: #{tpu_custom_call.1} parent=15 // pred_fallthru
          _
      $region16: #{tpu_custom_call.1} parent=5 // pred_fallthru
        _
      %p191 = scmp.le.s32.totalorder 1, %s15
      %p192 = scmp.lt.s32.totalorder %s15, 3
      %p193 = pnand %p191, %p192
      %p194 = pneg %p193
      // Predicated region
      $region25: #{tpu_custom_call.1} parent=5 // pred_check
        _
      $region26: #{tpu_custom_call.1} parent=5 // pred_check_branch
        %196 = sbr.rel (%p193) target = $region28
      $region27: #{tpu_custom_call.1} parent=5 // pred_region
        %s197 = ssub.s32 %s15, 1
        %s198 = sand.u32 %s42, 1
        %s199 = scalar_lea.sflag [#allocation5], %s198
        %s200 = sand.u32 %s42, 1
        %s201 = smul.addr %s200, 8
        %s202 = scalar_lea.vmem [#allocation4], %s201
        // Predicated region
        $region29: #{tpu_custom_call.1} parent=27 // pred_check
          %p203 = pneg %p55
        $region30: #{tpu_custom_call.1} parent=27 // pred_check_branch
          %205 = sbr.rel (%p203) target = $region32
        $region31: #{tpu_custom_call.1} parent=27 // pred_region
          %206 = dma.done %s199, 128
        $region32: #{tpu_custom_call.1} parent=27 // pred_fallthru
          _
        %s207 = sand.u32 %s42, 1
        %s208 = scalar_lea.sflag [#allocation5], %s207
        %s209 = sand.u32 %s42, 1
        %s210 = smul.addr %s209, 8
        %s211 = scalar_lea.vmem [#allocation4], %s210
        %p212 = pneg %p55
        %p213 = pneg %p52
        %s214 = smul.u32 2, %s25
        %p215 = scmp.lt.s32.totalorder %s24, 1
        %s216 = scalar_select %p215, %s24, 1
        %p217 = scmp.lt.s32.totalorder %s214, 1
        %s218 = scalar_select %p217, %s214, 1
        %s219 = smul.addr %s216, 2
        %s220 = sadd.s32 %s218, %s219
        %s221 = scalar_lea.vmem %s2, %s220
        %p222 = pneg %p83
        %p223 = pneg %p80
        %p224 = pneg %p111
        %p225 = pneg %p108
        %p226 = scmp.lt.s32.totalorder %s24, 1
        %s227 = scalar_select %p226, %s24, 1
        %p228 = scmp.lt.s32.totalorder %s25, 0
        %s229 = scalar_select %p228, %s25, 0
        %s230 = sadd.s32 %s229, %s227
        %s231 = scalar_lea.vmem %s3, %s230
        %p232 = pneg %p139
        %p233 = pneg %p136
        %p234 = scmp.lt.s32.totalorder %s24, 1
        %s235 = scalar_select %p234, %s24, 1
        %p236 = scmp.lt.s32.totalorder %s25, 0
        %s237 = scalar_select %p236, %s25, 0
        %s238 = sadd.s32 %s237, %s235
        %s239 = scalar_lea.vmem %s4, %s238
        %s240 = smul.u32 2, %s25
        %s241 = smul.u32 2, %s25
        %p242 = scmp.lt.s32.totalorder %s24, 1
        %s243 = scalar_select %p242, %s24, 1
        %p244 = scmp.lt.s32.totalorder %s241, 1
        %s245 = scalar_select %p244, %s241, 1
        %s246 = smul.addr %s243, 2
        %s247 = sadd.s32 %s245, %s246
        %s248 = scalar_lea.vmem %s2, %s247
        %s249 = smul.u32 2, %s25
        %p250 = scmp.lt.s32.totalorder %s24, 1
        %s251 = scalar_select %p250, %s24, 1
        %p252 = scmp.lt.s32.totalorder %s25, 0
        %s253 = scalar_select %p252, %s25, 0
        %s254 = sadd.s32 %s253, %s251
        %s255 = scalar_lea.vmem %s3, %s254
        %p256 = scmp.lt.s32.totalorder %s24, 1
        %s257 = scalar_select %p256, %s24, 1
        %p258 = scmp.lt.s32.totalorder %s25, 0
        %s259 = scalar_select %p258, %s25, 0
        %s260 = sadd.s32 %s259, %s257
        %s261 = scalar_lea.vmem %s4, %s260
        %v262 = vld [vmem:[%s202] sm:$0xff]
        %v263 = vld [vmem:[%s248] sm:$0x3]
        %s264 = sld [smem:[#allocation3]]
        %s265 = smul.u32 %s25, 256
        %v266 = vlaneseq
        %v267 = vand.u32 %v266, 127
        %v268 = vadd.s32 %v267, 128
        %v269 = vstv %s265
        %v270 = vadd.s32 %v269, %v267
        %v271 = vadd.s32 %v269, %v268
        %vm272 = vcmp.lt.s32.totalorder %v270, 200
        %vm273 = vcmp.lt.s32.totalorder %v271, 200
        %vm274 = vcmp.ge.s32.totalorder %v263, 0
        %v275 = vsel %vm274, 1, 0
        %v276 = vlaneseq
        %v277 = vshrl.u32 %v276, 7
        %v278 = vsub.s32 0, %v277
        %v279 = vrot.slane %v275, %v278
        %v280 = vlaneseq
        %v281 = vshrl.u32 %v280, 7
        %v282 = vsub.s32 1, %v281
        %v283 = vrot.slane %v275, %v282
        %vm284 = vcmp.ne.s32.totalorder %v279, 0
        %vm285 = vcmp.ne.s32.totalorder %v283, 0
        %vm286 = vmand %vm272, %vm284
        %vm287 = vmand %vm273, %vm285
        %v288 = vstv %s264
        %vm289 = vcmp.ne.s32.totalorder %v263, %v288
        %v290 = vsel %vm289, 1, 0
        %v291 = vlaneseq
        %v292 = vshrl.u32 %v291, 7
        %v293 = vsub.s32 0, %v292
        %v294 = vrot.slane %v290, %v293
        %v295 = vlaneseq
        %v296 = vshrl.u32 %v295, 7
        %v297 = vsub.s32 1, %v296
        %v298 = vrot.slane %v290, %v297
        %vm299 = vcmp.ne.s32.totalorder %v294, 0
        %vm300 = vcmp.ne.s32.totalorder %v298, 0
        %vm301 = vmand %vm286, %vm299
        %vm302 = vmand %vm287, %vm300
        %v304 = vcombine.high %v262, %v262
        %vm306 = vcmask 1043456
        %v307 = vsel %vm306, %v262, -inf
        %v308 = vrot.slane %v307, 4
        %v309 = vmax.f32 %v307, %v308
        %v310 = vrot.slane %v309, 2
        %v311 = vmax.f32 %v309, %v310
        %v312 = vrot.slane %v311, 1
        %v313 = vmax.f32 %v311, %v312
        %v314 = vsel %vm306, %v304, -inf
        %v315 = vrot.slane %v314, 4
        %v316 = vmax.f32 %v314, %v315
        %v317 = vrot.slane %v316, 2
        %v318 = vmax.f32 %v316, %v317
        %v319 = vrot.slane %v318, 1
        %v320 = vmax.f32 %v318, %v319
        %v323 = vcombine.low %v313, %v320
        %v325 = vsub.f32 %v262, %v323
        %v326 = vmul.f32 %v325, 1.442695
        %v327 = vpow.pop %v326
        %v329 = vcombine.high %v327, %v327
        %v331 = vsel %vm306, %v327, 0.0
        %v332 = vrot.slane %v331, 4
        %v333 = vadd.f32 %v331, %v332
        %v334 = vrot.slane %v333, 2
        %v335 = vadd.f32 %v333, %v334
        %v336 = vrot.slane %v335, 1
        %v337 = vadd.f32 %v335, %v336
        %v338 = vsel %vm306, %v329, 0.0
        %v339 = vrot.slane %v338, 4
        %v340 = vadd.f32 %v338, %v339
        %v341 = vrot.slane %v340, 2
        %v342 = vadd.f32 %v340, %v341
        %v343 = vrot.slane %v342, 1
        %v344 = vadd.f32 %v342, %v343
        %v345 = vlog2.pop %v337
        %v346 = vmul.f32 %v345, 0.6931472
        %v347 = vlog2.pop %v344
        %v348 = vmul.f32 %v347, 0.6931472
        %v349 = vadd.f32 %v313, %v346
        %v350 = vadd.f32 %v320, %v348
        %v351 = vlaneseq
        %v352 = vshrl.u32 %v351, 7
        %v353 = vlaneseq
        %v354 = vshrl.u32 %v353, 7
        %v355 = vsub.s32 0, %v354
        %v356 = vrot.slane %v263, %v355
        %v357 = vlaneseq
        %v358 = vshrl.u32 %v357, 7
        %v359 = vsub.s32 1, %v358
        %v360 = vrot.slane %v263, %v359
        %vm361 = vcmp.eq.s32.totalorder %v352, %v356
        %vm362 = vcmp.eq.s32.totalorder %v352, %v360
        %v363 = vsel %vm361, %v262, 0.0
        %v364 = vsel %vm362, %v304, 0.0
        %v365 = vsel %vm306, %v363, 0.0
        %v366 = vrot.slane %v365, 4
        %v367 = vadd.f32 %v365, %v366
        %v368 = vrot.slane %v367, 2
        %v369 = vadd.f32 %v367, %v368
        %v370 = vrot.slane %v369, 1
        %v371 = vadd.f32 %v369, %v370
        %v372 = vsel %vm306, %v364, 0.0
        %v373 = vrot.slane %v372, 4
        %v374 = vadd.f32 %v372, %v373
        %v375 = vrot.slane %v374, 2
        %v376 = vadd.f32 %v374, %v375
        %v377 = vrot.slane %v376, 1
        %v378 = vadd.f32 %v376, %v377
        %v379 = vsub.f32 %v349, %v371
        %v380 = vsub.f32 %v350, %v378
        %v381 = vsel %vm301, %v379, 0.0
        %v382 = vsel %vm302, %v380, 0.0
        %vm383 = vcmask 1040384
        %v384 = vsel %vm383, %v381, 0.0
        %v385 = vsel %vm383, %v382, 0.0
        %v386 = vadd.f32 %v384, %v385
        %387 = vadd.xlane.f32.xlu0 %v386
        %v388 = vpop.xlane.xlu0 %387
        %v389 = vrot.slane %v388, 4
        %v390 = vadd.f32 %v388, %v389
        %v391 = vrot.slane %v390, 2
        %v392 = vadd.f32 %v390, %v391
        %v393 = vrot.slane %v392, 1
        %v394 = vadd.f32 %v392, %v393
        %s395 = vtos %v394
        %v396 = vstv %s395
        %vm397 = vcmask 0
        %398 = vst.msk [vmem:[%s255] sm:$0x1] %vm397, %v396
        %v399 = vsel %vm301, 1, 0
        %v400 = vsel %vm302, 1, 0
        %v401 = vcvt.s32.f32 %v399
        %v402 = vcvt.s32.f32 %v400
        %v403 = vsel %vm383, %v401, 0.0
        %v404 = vsel %vm383, %v402, 0.0
        %v405 = vadd.f32 %v403, %v404
        %406 = vadd.xlane.f32.xlu0 %v405
        %v407 = vpop.xlane.xlu0 %406
        %v408 = vrot.slane %v407, 4
        %v409 = vadd.f32 %v407, %v408
        %v410 = vrot.slane %v409, 2
        %v411 = vadd.f32 %v409, %v410
        %v412 = vrot.slane %v411, 1
        %v413 = vadd.f32 %v411, %v412
        %s414 = vtos %v413
        %v415 = vstv %s414
        %416 = vst.msk [vmem:[%s261] sm:$0x1] %vm397, %v415
        %p417 = scmp.lt.s32.totalorder %s24, 1
        %s418 = scalar_select %p417, %s24, 1
        %p419 = scmp.lt.s32.totalorder %s25, 0
        %s420 = scalar_select %p419, %s25, 0
        %s421 = sadd.s32 %s420, %s418
        %s422 = scalar_lea.vmem %s3, %s421
        %p423 = scmp.lt.s32.totalorder %s24, 1
        %s424 = scalar_select %p423, %s24, 1
        %p425 = scmp.lt.s32.totalorder %s25, 0
        %s426 = scalar_select %p425, %s25, 0
        %s427 = sadd.s32 %s426, %s424
        %s428 = scalar_lea.vmem %s4, %s427
        // Predicated region
        $region33: #{tpu_custom_call.1} parent=27 // pred_check
          %p429 = pneg %p108
        $region34: #{tpu_custom_call.1} parent=27 // pred_check_branch
          %431 = sbr.rel (%p429) target = $region36
        $region35: #{tpu_custom_call.1} parent=27 // pred_region
          _
        $region36: #{tpu_custom_call.1} parent=27 // pred_fallthru
          _
        // Predicated region
        $region37: #{tpu_custom_call.1} parent=27 // pred_check
          %p432 = pneg %p136
        $region38: #{tpu_custom_call.1} parent=27 // pred_check_branch
          %434 = sbr.rel (%p432) target = $region40
        $region39: #{tpu_custom_call.1} parent=27 // pred_region
          _
        $region40: #{tpu_custom_call.1} parent=27 // pred_fallthru
          _
      $region28: #{tpu_custom_call.1} parent=5 // pred_fallthru
        _
      %p435 = scmp.le.s32.totalorder 2, %s15
      // Predicated region
      $region41: #{tpu_custom_call.1} parent=5 // pred_check
        %p436 = pneg %p435
      $region42: #{tpu_custom_call.1} parent=5 // pred_check_branch
        %438 = sbr.rel (%p436) target = $region44
      $region43: #{tpu_custom_call.1} parent=5 // pred_region
        %s439 = ssub.s32 %s15, 2
        // Predicated region
        $region45: #{tpu_custom_call.1} parent=43 // pred_check
          %p440 = pneg %p114
        $region46: #{tpu_custom_call.1} parent=43 // pred_check_branch
          %442 = sbr.rel (%p440) target = $region48
        $region47: #{tpu_custom_call.1} parent=43 // pred_region
          %p443 = scmp.lt.s32.totalorder %s26, 1
          %s444 = scalar_select %p443, %s26, 1
          %p445 = scmp.lt.s32.totalorder %s27, 0
          %s446 = scalar_select %p445, %s27, 0
          %s447 = sadd.s32 %s446, %s444
          %s448 = scalar_lea.vmem %s3, %s447
        $region48: #{tpu_custom_call.1} parent=43 // pred_fallthru
          _
        // Predicated region
        $region49: #{tpu_custom_call.1} parent=43 // pred_check
          %p449 = pneg %p142
        $region50: #{tpu_custom_call.1} parent=43 // pred_check_branch
          %451 = sbr.rel (%p449) target = $region52
        $region51: #{tpu_custom_call.1} parent=43 // pred_region
          %p452 = scmp.lt.s32.totalorder %s26, 1
          %s453 = scalar_select %p452, %s26, 1
          %p454 = scmp.lt.s32.totalorder %s27, 0
          %s455 = scalar_select %p454, %s27, 0
          %s456 = sadd.s32 %s455, %s453
          %s457 = scalar_lea.vmem %s4, %s456
        $region52: #{tpu_custom_call.1} parent=43 // pred_fallthru
          _
      $region44: #{tpu_custom_call.1} parent=5 // pred_fallthru
        _
    $region6: #{tpu_custom_call.1} parent=1 // loop_footer
      %s19 = sadd.s32 1, %s15
    $region7: #{tpu_custom_call.1} parent=1 // loop_footer_branch
      %14 = sbr.rel target = $region3
    $region8: #{tpu_custom_call.1} parent=1 // loop_exit
      _
    %458 = vsyncpa [#allocation5], 1
    %s459 = scalar_lea.sflag [#allocation5], 1
    %460 = vsyncpa %s459, 1

</llo_original>
